<compile_context>
chip_gen: v5e
topology: v5e:2x2
jax: 0.10.0
libtpu: 0.0.40
codegen_flags: <defaults>
</compile_context>

<pallas_src>
import jax
import jax.numpy as jnp
import numpy as np
from jax import lax
from jax.experimental import pallas as pl
from jax.experimental.pallas import tpu as pltpu

_LANE = 128  # TPU lane width


def _make_resmlp_kernel(num_mid_layers: int, compute_dtype):
    """Fused ResMLP kernel for a fixed (static) number of middle residual layers."""

    def kernel(xi_ref, xj_ref, w0i_ref, w0j_ref, b0_ref, *rest):
        # rest = [w_mid0, b_mid0, ..., w_mid{M-1}, b_mid{M-1}, w_last_row, b_last, out_ref]
        mid_refs = rest[: 2 * num_mid_layers]
        w_last_ref, b_last_ref, out_ref = rest[2 * num_mid_layers:]

        # Layer 0: Linear(input_dim, hidden) + ReLU  (dropout == identity in eval mode).
        # Concatenation is folded into two matmuls against the split W0 halves.
        xi = xi_ref[...].astype(compute_dtype)
        xj = xj_ref[...].astype(compute_dtype)
        h = jnp.dot(xi, w0i_ref[...], preferred_element_type=jnp.float32)
        h = h + jnp.dot(xj, w0j_ref[...], preferred_element_type=jnp.float32)
        h = jnp.maximum(h + b0_ref[...], 0.0)            # bias + ReLU in f32

        # Middle residual layers: h = relu(Linear(h) + h)   (dropout == identity).
        for l in range(num_mid_layers):
            w = mid_refs[2 * l][...]                      # bf16 (or f32) weights
            b = mid_refs[2 * l + 1][...]                  # f32 bias, read once per layer
            identity = h
            y = jnp.dot(h.astype(compute_dtype), w, preferred_element_type=jnp.float32)
            h = jnp.maximum(y + b + identity, 0.0)        # bias/residual/ReLU in f32

        # Final Linear(hidden, 1): contract the hidden dim of the (1, Hp) weight row against
        # h's last axis -> (1, batch_tile) logits row, already lane-dense for the store.
        logits = lax.dot_general(
            w_last_ref[...], h,
            dimension_numbers=(((1,), (1,)), ((), ())),
            preferred_element_type=jnp.float32)           # (1, tile)
        out_ref[...] = (logits + b_last_ref[...]).astype(out_ref.dtype)

    return kernel


def _pad_axis(a, axis, multiple):
    size = a.shape[axis]
    pad = (-size) % multiple
    if pad == 0:
        return a
    widths = [(0, 0)] * a.ndim
    widths[axis] = (0, pad)
    return jnp.pad(a, widths)


def resmlp_forward(node_i, node_j, params, *, batch_tile=128, use_bf16_matmul=True):
    """ResMLP forward pass (eval mode).

    params = (w0, b0, [(w_mid, b_mid), ...], w_last, b_last) with weights stored as
    [in_features, out_features] (transposed vs. torch nn.Linear.weight) and biases [1, out].
    Returns logits of shape [batch, 1].
    """
    w0, b0, mids, w_last, b_last = params
    B, E = node_i.shape
    assert node_j.shape == (B, E)
    assert w0.shape[0] == 2 * E, "w0 must have input_dim = 2 * embed_dim rows"

    mm_dtype = jnp.bfloat16 if use_bf16_matmul else jnp.float32

    # --- parameter prep: split W0, zero-pad feature dims to 128 lanes, cast matmul operands.
    w0_i = _pad_axis(_pad_axis(w0[:E], 0, _LANE), 1, _LANE).astype(mm_dtype)
    w0_j = _pad_axis(_pad_axis(w0[E:], 0, _LANE), 1, _LANE).astype(mm_dtype)
    b0_p = _pad_axis(b0, 1, _LANE).astype(jnp.float32)
    mid_args = []
    for (wm, bm) in mids:
        mid_args.append(_pad_axis(_pad_axis(wm, 0, _LANE), 1, _LANE).astype(mm_dtype))
        mid_args.append(_pad_axis(bm, 1, _LANE).astype(jnp.float32))
    w_last_row = _pad_axis(w_last.T, 1, _LANE).astype(jnp.float32)    # (1, Hp), kept f32
    b_last_p = b_last.astype(jnp.float32)                             # (1, 1)

    # --- activation prep: pad batch to a multiple of batch_tile, features to 128 lanes.
    xi = _pad_axis(_pad_axis(node_i, 0, batch_tile), 1, _LANE)
    xj = _pad_axis(_pad_axis(node_j, 0, batch_tile), 1, _LANE)
    Bp, Ep = xi.shape
    grid = Bp // batch_tile

    weight_args = [w0_i, w0_j, b0_p] + mid_args + [w_last_row, b_last_p]

    def const_spec(a):
        # Grid-invariant block: full array, always block (0, 0) -> DMA'd once by the pipeline.
        return pl.BlockSpec(a.shape, lambda i: (0,) * a.ndim)

    in_specs = [pl.BlockSpec((batch_tile, Ep), lambda i: (i, 0)),
                pl.BlockSpec((batch_tile, Ep), lambda i: (i, 0))]
    in_specs += [const_spec(a) for a in weight_args]

    # Lane-dense output: one (1, batch_tile) row per grid step of a (1, Bp) logits row.
    out_spec = pl.BlockSpec((1, batch_tile), lambda i: (0, i))

    kernel = _make_resmlp_kernel(len(mids), mm_dtype)

    out_row = pl.pallas_call(
        kernel,
        out_shape=jax.ShapeDtypeStruct((1, Bp), jnp.float32),
        grid=(grid,),
        in_specs=in_specs,
        out_specs=out_spec,
        compiler_params=pltpu.CompilerParams(
            dimension_semantics=("parallel",),          # shard batch grid across TCs (v7x)
            vmem_limit_bytes=32 * 1024 * 1024),         # explicit budget, valid on 64 MiB v7x
    )(xi, xj, *weight_args)

    # (1, Bp) lane-dense row -> (B, 1) logits (drop batch padding). Free layout work in XLA.
    return out_row.reshape(Bp, 1)[:B]


def init_resmlp_params(key, input_dim, hidden_dim, num_layers):
    """Deterministic synthetic parameter init (shapes match the torch module)."""
    if num_layers < 2:
        raise ValueError("num_layers must be at least 2")
    keys = jax.random.split(key, num_layers)

    def lin(k, fan_in, fan_out):
        kw, kb = jax.random.split(k)
        scale = 1.0 / np.sqrt(fan_in)
        w = jax.random.uniform(kw, (fan_in, fan_out), jnp.float32, -scale, scale)
        b = jax.random.uniform(kb, (1, fan_out), jnp.float32, -scale, scale)
        return w, b

    w0, b0 = lin(keys[0], input_dim, hidden_dim)
    mids = []
    for l in range(1, num_layers - 1):
        mids.append(lin(keys[l], hidden_dim, hidden_dim))
    w_last, b_last = lin(keys[-1], hidden_dim, 1)
    return (w0, b0, mids, w_last, b_last)


def resmlp_reference(node_i, node_j, params, use_bf16_matmul=True):
    """Pure-JAX reference (eval-mode dropout) matching the kernel's matmul precision policy."""
    w0, b0, mids, w_last, b_last = params
    mm = jnp.bfloat16 if use_bf16_matmul else jnp.float32
    x = jnp.concatenate([node_i, node_j], axis=-1)
    h = jax.nn.relu(
        jnp.dot(x.astype(mm), w0.astype(mm), preferred_element_type=jnp.float32) + b0)
    for (wm, bm) in mids:
        y = jnp.dot(h.astype(mm), wm.astype(mm), preferred_element_type=jnp.float32)
        h = jax.nn.relu(y + bm + h)
    return jnp.dot(h, w_last, preferred_element_type=jnp.float32) + b_last


if __name__ == "__main__":
    # Small but non-degenerate shapes: batch=512 with batch_tile=128 -> grid of 4 steps
    # (pipelining + both v7x cores busy). Per-node embedding 48 (-> input_dim 96), hidden 96
    # and a 4-layer MLP (2 residual middle layers); feature dims get zero-padded to 128 lanes.
    batch = 512
    embed_dim = 48
    input_dim = 2 * embed_dim
    hidden_dim = 96
    num_layers = 4

    key = jax.random.PRNGKey(0)
    k_i, k_j, k_p = jax.random.split(key, 3)
    node_i = jax.random.normal(k_i, (batch, embed_dim), jnp.float32)
    node_j = jax.random.normal(k_j, (batch, embed_dim), jnp.float32)
    params = init_resmlp_params(k_p, input_dim, hidden_dim, num_layers)

    out = resmlp_forward(node_i, node_j, params, batch_tile=128, use_bf16_matmul=True)
    out = jax.block_until_ready(out)
    assert out.shape == (batch, 1), out.shape

    ref = resmlp_reference(node_i, node_j, params, use_bf16_matmul=True)
    np.testing.assert_allclose(np.asarray(out), np.asarray(ref), rtol=2e-2, atol=2e-2)

    print("KERNEL_OK")
</pallas_src>

<mosaic_0001>
module attributes {stable_mosaic.version = 11 : i64} {
  func.func @kernel(%arg0: i32, %arg1: memref<128x128xf32, #tpu.memory_space<vmem>>, %arg2: memref<128x128xf32, #tpu.memory_space<vmem>>, %arg3: memref<128x128xbf16, #tpu.memory_space<vmem>>, %arg4: memref<128x128xbf16, #tpu.memory_space<vmem>>, %arg5: memref<1x128xf32, #tpu.memory_space<vmem>>, %arg6: memref<128x128xbf16, #tpu.memory_space<vmem>>, %arg7: memref<1x128xf32, #tpu.memory_space<vmem>>, %arg8: memref<128x128xbf16, #tpu.memory_space<vmem>>, %arg9: memref<1x128xf32, #tpu.memory_space<vmem>>, %arg10: memref<1x128xf32, #tpu.memory_space<vmem>>, %arg11: memref<1x1xf32, #tpu.memory_space<vmem>>, %arg12: memref<1x128xf32, #tpu.memory_space<vmem>>) attributes {dimension_semantics = [#tpu.dimension_semantics<parallel>], iteration_bounds = array<i64: 4>, scalar_prefetch = 0 : i64, scratch_operands = 0 : i64, tpu.core_type = #tpu.core_type<tc>, window_params = [{transform_indices = @transform_0, window_bounds = array<i64: 128, 128>}, {transform_indices = @transform_1, window_bounds = array<i64: 128, 128>}, {pipeline_mode = #tpu.pipeline_mode<synchronous>, transform_indices = @transform_2, window_bounds = array<i64: 128, 128>}, {pipeline_mode = #tpu.pipeline_mode<synchronous>, transform_indices = @transform_3, window_bounds = array<i64: 128, 128>}, {pipeline_mode = #tpu.pipeline_mode<synchronous>, transform_indices = @transform_4, window_bounds = array<i64: 1, 128>}, {pipeline_mode = #tpu.pipeline_mode<synchronous>, transform_indices = @transform_5, window_bounds = array<i64: 128, 128>}, {pipeline_mode = #tpu.pipeline_mode<synchronous>, transform_indices = @transform_6, window_bounds = array<i64: 1, 128>}, {pipeline_mode = #tpu.pipeline_mode<synchronous>, transform_indices = @transform_7, window_bounds = array<i64: 128, 128>}, {pipeline_mode = #tpu.pipeline_mode<synchronous>, transform_indices = @transform_8, window_bounds = array<i64: 1, 128>}, {pipeline_mode = #tpu.pipeline_mode<synchronous>, transform_indices = @transform_9, window_bounds = array<i64: 1, 128>}, {pipeline_mode = #tpu.pipeline_mode<synchronous>, transform_indices = @transform_10, window_bounds = array<i64: 1, 1>}, {transform_indices = @transform_11, window_bounds = array<i64: 1, 128>}]} {
    %c0 = arith.constant 0 : index
    %c0_0 = arith.constant 0 : index
    %0 = vector.load %arg1[%c0, %c0_0] : memref<128x128xf32, #tpu.memory_space<vmem>>, vector<128x128xf32>
    %1 = arith.truncf %0 : vector<128x128xf32> to vector<128x128xbf16>
    %c0_1 = arith.constant 0 : index
    %c0_2 = arith.constant 0 : index
    %2 = vector.load %arg2[%c0_1, %c0_2] : memref<128x128xf32, #tpu.memory_space<vmem>>, vector<128x128xf32>
    %3 = arith.truncf %2 : vector<128x128xf32> to vector<128x128xbf16>
    %c0_3 = arith.constant 0 : index
    %c0_4 = arith.constant 0 : index
    %4 = vector.load %arg3[%c0_3, %c0_4] : memref<128x128xbf16, #tpu.memory_space<vmem>>, vector<128x128xbf16>
    %cst = arith.constant dense<0.000000e+00> : vector<128x128xf32>
    %5 = tpu.matmul %1, %4, %cst {dimension_numbers = #tpu.dot_dimension_numbers<[1], [0], [0], [1], [0, 0, 1, 1], [], []>} : vector<128x128xbf16>, vector<128x128xbf16>, vector<128x128xf32> -> vector<128x128xf32>
    %c0_5 = arith.constant 0 : index
    %c0_6 = arith.constant 0 : index
    %6 = vector.load %arg4[%c0_5, %c0_6] : memref<128x128xbf16, #tpu.memory_space<vmem>>, vector<128x128xbf16>
    %cst_7 = arith.constant dense<0.000000e+00> : vector<128x128xf32>
    %7 = tpu.matmul %3, %6, %cst_7 {dimension_numbers = #tpu.dot_dimension_numbers<[1], [0], [0], [1], [0, 0, 1, 1], [], []>} : vector<128x128xbf16>, vector<128x128xbf16>, vector<128x128xf32> -> vector<128x128xf32>
    %8 = arith.addf %5, %7 : vector<128x128xf32>
    %c0_8 = arith.constant 0 : index
    %c0_9 = arith.constant 0 : index
    %9 = vector.load %arg5[%c0_8, %c0_9] : memref<1x128xf32, #tpu.memory_space<vmem>>, vector<1x128xf32>
    %10 = vector.broadcast %9 : vector<1x128xf32> to vector<128x128xf32>
    %11 = arith.addf %8, %10 : vector<128x128xf32>
    %cst_10 = arith.constant 0.000000e+00 : f32
    %12 = vector.broadcast %cst_10 : f32 to vector<128x128xf32>
    %13 = arith.maximumf %11, %12 : vector<128x128xf32>
    %c0_11 = arith.constant 0 : index
    %c0_12 = arith.constant 0 : index
    %14 = vector.load %arg6[%c0_11, %c0_12] : memref<128x128xbf16, #tpu.memory_space<vmem>>, vector<128x128xbf16>
    %c0_13 = arith.constant 0 : index
    %c0_14 = arith.constant 0 : index
    %15 = vector.load %arg7[%c0_13, %c0_14] : memref<1x128xf32, #tpu.memory_space<vmem>>, vector<1x128xf32>
    %16 = arith.truncf %13 : vector<128x128xf32> to vector<128x128xbf16>
    %cst_15 = arith.constant dense<0.000000e+00> : vector<128x128xf32>
    %17 = tpu.matmul %16, %14, %cst_15 {dimension_numbers = #tpu.dot_dimension_numbers<[1], [0], [0], [1], [0, 0, 1, 1], [], []>} : vector<128x128xbf16>, vector<128x128xbf16>, vector<128x128xf32> -> vector<128x128xf32>
    %18 = vector.broadcast %15 : vector<1x128xf32> to vector<128x128xf32>
    %19 = arith.addf %17, %18 : vector<128x128xf32>
    %20 = arith.addf %19, %13 : vector<128x128xf32>
    %cst_16 = arith.constant 0.000000e+00 : f32
    %21 = vector.broadcast %cst_16 : f32 to vector<128x128xf32>
    %22 = arith.maximumf %20, %21 : vector<128x128xf32>
    %c0_17 = arith.constant 0 : index
    %c0_18 = arith.constant 0 : index
    %23 = vector.load %arg8[%c0_17, %c0_18] : memref<128x128xbf16, #tpu.memory_space<vmem>>, vector<128x128xbf16>
    %c0_19 = arith.constant 0 : index
    %c0_20 = arith.constant 0 : index
    %24 = vector.load %arg9[%c0_19, %c0_20] : memref<1x128xf32, #tpu.memory_space<vmem>>, vector<1x128xf32>
    %25 = arith.truncf %22 : vector<128x128xf32> to vector<128x128xbf16>
    %cst_21 = arith.constant dense<0.000000e+00> : vector<128x128xf32>
    %26 = tpu.matmul %25, %23, %cst_21 {dimension_numbers = #tpu.dot_dimension_numbers<[1], [0], [0], [1], [0, 0, 1, 1], [], []>} : vector<128x128xbf16>, vector<128x128xbf16>, vector<128x128xf32> -> vector<128x128xf32>
    %27 = vector.broadcast %24 : vector<1x128xf32> to vector<128x128xf32>
    %28 = arith.addf %26, %27 : vector<128x128xf32>
    %29 = arith.addf %28, %22 : vector<128x128xf32>
    %cst_22 = arith.constant 0.000000e+00 : f32
    %30 = vector.broadcast %cst_22 : f32 to vector<128x128xf32>
    %31 = arith.maximumf %29, %30 : vector<128x128xf32>
    %c0_23 = arith.constant 0 : index
    %c0_24 = arith.constant 0 : index
    %32 = vector.load %arg10[%c0_23, %c0_24] : memref<1x128xf32, #tpu.memory_space<vmem>>, vector<1x128xf32>
    %cst_25 = arith.constant dense<0.000000e+00> : vector<1x128xf32>
    %33 = tpu.matmul %32, %31, %cst_25 {dimension_numbers = #tpu.dot_dimension_numbers<[1], [1], [0], [0], [0, 0, 1, 0], [], []>} : vector<1x128xf32>, vector<128x128xf32>, vector<1x128xf32> -> vector<1x128xf32>
    %c0_26 = arith.constant 0 : index
    %c0_27 = arith.constant 0 : index
    %34 = vector.load %arg11[%c0_26, %c0_27] : memref<1x1xf32, #tpu.memory_space<vmem>>, vector<1x1xf32>
    %35 = vector.broadcast %34 : vector<1x1xf32> to vector<1x128xf32>
    %36 = arith.addf %33, %35 : vector<1x128xf32>
    %c0_28 = arith.constant 0 : index
    %c0_29 = arith.constant 0 : index
    %37 = vector.load %arg12[%c0_28, %c0_29] : memref<1x128xf32, #tpu.memory_space<vmem>>, vector<1x128xf32>
    tpu.vector_store %arg12[%c0_28, %c0_29], %36 {strides = array<i32>} : memref<1x128xf32, #tpu.memory_space<vmem>>, vector<1x128xf32>,
    return
  }
  func.func @transform_0(%arg0: i32) -> (i32, i32) {
    %c0_i32 = arith.constant 0 : i32
    %c0_i32_0 = arith.constant 0 : i32
    return %arg0, %c0_i32 : i32, i32
  }
  func.func @transform_1(%arg0: i32) -> (i32, i32) {
    %c0_i32 = arith.constant 0 : i32
    %c0_i32_0 = arith.constant 0 : i32
    return %arg0, %c0_i32 : i32, i32
  }
  func.func @transform_2(%arg0: i32) -> (i32, i32) {
    %c0_i32 = arith.constant 0 : i32
    %c0_i32_0 = arith.constant 0 : i32
    %c0_i32_1 = arith.constant 0 : i32
    return %c0_i32, %c0_i32_0 : i32, i32
  }
  func.func @transform_3(%arg0: i32) -> (i32, i32) {
    %c0_i32 = arith.constant 0 : i32
    %c0_i32_0 = arith.constant 0 : i32
    %c0_i32_1 = arith.constant 0 : i32
    return %c0_i32, %c0_i32_0 : i32, i32
  }
  func.func @transform_4(%arg0: i32) -> (i32, i32) {
    %c0_i32 = arith.constant 0 : i32
    %c0_i32_0 = arith.constant 0 : i32
    %c0_i32_1 = arith.constant 0 : i32
    return %c0_i32, %c0_i32_0 : i32, i32
  }
  func.func @transform_5(%arg0: i32) -> (i32, i32) {
    %c0_i32 = arith.constant 0 : i32
    %c0_i32_0 = arith.constant 0 : i32
    %c0_i32_1 = arith.constant 0 : i32
    return %c0_i32, %c0_i32_0 : i32, i32
  }
  func.func @transform_6(%arg0: i32) -> (i32, i32) {
    %c0_i32 = arith.constant 0 : i32
    %c0_i32_0 = arith.constant 0 : i32
    %c0_i32_1 = arith.constant 0 : i32
    return %c0_i32, %c0_i32_0 : i32, i32
  }
  func.func @transform_7(%arg0: i32) -> (i32, i32) {
    %c0_i32 = arith.constant 0 : i32
    %c0_i32_0 = arith.constant 0 : i32
    %c0_i32_1 = arith.constant 0 : i32
    return %c0_i32, %c0_i32_0 : i32, i32
  }
  func.func @transform_8(%arg0: i32) -> (i32, i32) {
    %c0_i32 = arith.constant 0 : i32
    %c0_i32_0 = arith.constant 0 : i32
    %c0_i32_1 = arith.constant 0 : i32
    return %c0_i32, %c0_i32_0 : i32, i32
  }
  func.func @transform_9(%arg0: i32) -> (i32, i32) {
    %c0_i32 = arith.constant 0 : i32
    %c0_i32_0 = arith.constant 0 : i32
    %c0_i32_1 = arith.constant 0 : i32
    return %c0_i32, %c0_i32_0 : i32, i32
  }
  func.func @transform_10(%arg0: i32) -> (i32, i32) {
    %c0_i32 = arith.constant 0 : i32
    %c0_i32_0 = arith.constant 0 : i32
    %c0_i32_1 = arith.constant 0 : i32
    return %c0_i32, %c0_i32_0 : i32, i32
  }
  func.func @transform_11(%arg0: i32) -> (i32, i32) {
    %c0_i32 = arith.constant 0 : i32
    %c0_i32_0 = arith.constant 0 : i32
    return %c0_i32, %arg0 : i32, i32
  }
}

</mosaic_0001>

<llo_original>
// kernel: tpu_custom_call.1
$region0: #{tpu_custom_call.1}
  #allocation0 [shape = 'u32[]', space=smem, size = 0x4, offset = 0x4, fixed_abs, tag = 'smem constant byte address 0x4 - core index']
  #allocation1 [shape = 'u32[72,128]{1,0:T(1,128)}', space=vmem, size = 0x9000, scoped, tag = 'internal scratch']
  #allocation2 [shape = 'f32[1,1]{1,0:T(1,128)S(1)}', space=vmem, size = 0x200, scoped, tag = 'scoped memory for tpu_custom_call.1']
  %s0 = inlined_call_operand.hbm [shape: f32[512,128], index: 0, kind: input, shape index: {}]
  %s1 = inlined_call_operand.hbm [shape: f32[512,128], index: 1, kind: input, shape index: {}]
  %s2 = inlined_call_operand.hbm [shape: bf16[128,128], index: 2, kind: input, shape index: {}]
  %s3 = inlined_call_operand.hbm [shape: bf16[128,128], index: 3, kind: input, shape index: {}]
  %s4 = inlined_call_operand.vmem [shape: f32[1,128], index: 4, kind: input, shape index: {}]
  %s5 = inlined_call_operand.hbm [shape: bf16[128,128], index: 5, kind: input, shape index: {}]
  %s6 = inlined_call_operand.vmem [shape: f32[1,128], index: 6, kind: input, shape index: {}]
  %s7 = inlined_call_operand.hbm [shape: bf16[128,128], index: 7, kind: input, shape index: {}]
  %s8 = inlined_call_operand.vmem [shape: f32[1,128], index: 8, kind: input, shape index: {}]
  %s9 = inlined_call_operand.vmem [shape: f32[1,128], index: 9, kind: input, shape index: {}]
  %s10 = inlined_call_operand.<no memory space> [shape: f32[1,1], index: 10, kind: input, shape index: {}]
  %s11 = inlined_call_operand.hbm [shape: f32[1,512], index: 11, kind: output, shape index: {}]
  %s12 = sld [smem:[#allocation0]]
  $region101: #{tpu_custom_call.1} parent=0
    _
  %s14 = ssub.s32 1, %s12
  %s15 = scalar_select 0, %s14, %s12
  %v16 = vstv %s10
  %17 = vst [vmem:[#allocation2] sm:$0x1] %v16
  $region1: #{tpu_custom_call.1} parent=0
    #allocation3 [shape = 'u8[131072]{0}', space=vmem, size = 0x20000, scoped, tag = 'input window, operand 0']
    #allocation4 [shape = 's32[2]{0}', space=sflag, size = 0x8, scoped, tag = 'scoped memory for tpu_custom_call.1']
    #allocation5 [shape = 's32[2]{0}', space=sflag, size = 0x8, scoped, tag = 'scoped memory for tpu_custom_call.1']
    #allocation6 [shape = 'u8[131072]{0}', space=vmem, size = 0x20000, scoped, tag = 'input window, operand 1']
    #allocation7 [shape = 's32[2]{0}', space=sflag, size = 0x8, scoped, tag = 'scoped memory for tpu_custom_call.1']
    #allocation8 [shape = 'u8[32768]{0}', space=vmem, size = 0x8000, scoped, tag = 'input window, operand 2, single buffered']
    #allocation9 [shape = 'u8[32768]{0}', space=vmem, size = 0x8000, scoped, tag = 'input window, operand 3, single buffered']
    #allocation10 [shape = 's32[1]{0}', space=sflag, size = 0x4, scoped, tag = 'scoped memory for tpu_custom_call.1']
    #allocation11 [shape = 'u8[32768]{0}', space=vmem, size = 0x8000, scoped, tag = 'input window, operand 5, single buffered']
    #allocation12 [shape = 'u8[32768]{0}', space=vmem, size = 0x8000, scoped, tag = 'input window, operand 7, single buffered']
    #allocation13 [shape = 's32[1]{0}', space=sflag, size = 0x4, scoped, tag = 'scoped memory for tpu_custom_call.1']
    #allocation14 [shape = 'u8[1024]{0}', space=vmem, size = 0x400, scoped, tag = 'output window, operand 0']
    %18 = vsyncpa [#allocation4], 0
    %s19 = scalar_lea.sflag [#allocation4], 1
    %20 = vsyncpa %s19, 0
    %21 = vsyncpa [#allocation7], 0
    %s22 = scalar_lea.sflag [#allocation7], 1
    %23 = vsyncpa %s22, 0
    %24 = vsyncpa [#allocation10], 0
    %25 = vsyncpa [#allocation13], 0
    %26 = vsyncpa [#allocation5], 0
    %s27 = scalar_lea.sflag [#allocation5], 1
    %28 = vsyncpa %s27, 0
    loop: start=0, step=1, limit=6
    $region2: #{tpu_custom_call.1} parent=1 // loop_pre_header
      _
    $region3: #{tpu_custom_call.1} parent=1 // loop_header
      %s30 = sphi 0, %s34
      %p31 = scmp.ge.s32.totalorder %s30, 6
      %s40 = sphi 0, %s42
      %s43 = sphi 0, %s40
      %s44 = sphi 0, %s43
      %s60 = sphi 0, %s44
      %s66 = sphi 0, %s68
      %s69 = sphi 0, %s66
      %s70 = sphi 0, %s69
      %s86 = sphi 0, %s70
      %s90 = sphi 0, %s90
      %s92 = sphi 0, %s90
      %s93 = sphi 0, %s92
      %s107 = sphi 0, %s93
      %s111 = sphi 0, %s111
      %s113 = sphi 0, %s111
      %s114 = sphi 0, %s113
      %s128 = sphi 0, %s114
      %s132 = sphi 0, %s132
      %s134 = sphi 0, %s132
      %s135 = sphi 0, %s134
      %s149 = sphi 0, %s135
      %s153 = sphi 0, %s153
      %s155 = sphi 0, %s153
      %s156 = sphi 0, %s155
      %s170 = sphi 0, %s156
      %s174 = sphi 0, %s174
      %s176 = sphi 0, %s174
      %s177 = sphi 0, %s176
      %s191 = sphi 0, %s177
      %s195 = sphi 0, %s195
      %s197 = sphi 0, %s195
      %s198 = sphi 0, %s197
      %s212 = sphi 0, %s198
      %s216 = sphi 0, %s216
      %s218 = sphi 0, %s216
      %s219 = sphi 0, %s218
      %s233 = sphi 0, %s219
      %s237 = sphi 0, %s237
      %s239 = sphi 0, %s237
      %s240 = sphi 0, %s239
      %s254 = sphi 0, %s240
      %s258 = sphi 0, %s258
      %s260 = sphi 0, %s258
      %s261 = sphi 0, %s260
      %s275 = sphi 0, %s261
      %s281 = sphi 0, %s283
      %s284 = sphi 0, %s281
      %s285 = sphi 0, %s284
      %s301 = sphi 0, %s285
    $region4: #{tpu_custom_call.1} parent=1 // loop_header_branch
      %33 = sbr.rel (%p31) target = $region8
    $region5: #{tpu_custom_call.1} parent=1 // loop_body
      %s35 = ssub.s32 %s30, 1
      %s36 = ssub.s32 %s30, 2
      %s37 = sadd.s32 %s30, 1
      %s38 = ssub.s32 %s30, %s37
      %p39 = scmp.eq.s32.totalorder %s38, 0
      %s41 = sadd.s32 %s40, 1
      %s42 = scalar_select %p39, %s40, %s41
      %p45 = pneg %p39
      %p46 = scmp.eq.s32.totalorder %s30, 3
      %p47 = por %p45, %p46
      %p48 = scmp.ne.s32.totalorder %s40, %s43
      %p49 = scmp.eq.s32.totalorder %s30, 0
      %p50 = por %p48, %p49
      %p51 = scmp.ne.s32.totalorder %s40, %s43
      %p52 = scmp.eq.s32.totalorder %s35, 3
      %p53 = por %p51, %p52
      %p54 = scmp.ne.s32.totalorder %s43, %s44
      %p55 = scmp.eq.s32.totalorder %s35, 0
      %p56 = por %p54, %p55
      %p57 = scmp.ne.s32.totalorder %s43, %s44
      %p58 = scmp.eq.s32.totalorder %s36, 3
      %p59 = por %p57, %p58
      %p61 = scmp.ne.s32.totalorder %s44, %s60
      %p62 = scmp.eq.s32.totalorder %s36, 0
      %p63 = por %p61, %p62
      %s64 = ssub.s32 %s30, %s37
      %p65 = scmp.eq.s32.totalorder %s64, 0
      %s67 = sadd.s32 %s66, 1
      %s68 = scalar_select %p65, %s66, %s67
      %p71 = pneg %p65
      %p72 = scmp.eq.s32.totalorder %s30, 3
      %p73 = por %p71, %p72
      %p74 = scmp.ne.s32.totalorder %s66, %s69
      %p75 = scmp.eq.s32.totalorder %s30, 0
      %p76 = por %p74, %p75
      %p77 = scmp.ne.s32.totalorder %s66, %s69
      %p78 = scmp.eq.s32.totalorder %s35, 3
      %p79 = por %p77, %p78
      %p80 = scmp.ne.s32.totalorder %s69, %s70
      %p81 = scmp.eq.s32.totalorder %s35, 0
      %p82 = por %p80, %p81
      %p83 = scmp.ne.s32.totalorder %s69, %s70
      %p84 = scmp.eq.s32.totalorder %s36, 3
      %p85 = por %p83, %p84
      %p87 = scmp.ne.s32.totalorder %s70, %s86
      %p88 = scmp.eq.s32.totalorder %s36, 0
      %p89 = por %p87, %p88
      %s91 = sadd.s32 %s90, 1
      %p94 = scmp.eq.s32.totalorder %s30, 3
      %p95 = scmp.ne.s32.totalorder %s90, %s92
      %p96 = scmp.eq.s32.totalorder %s30, 0
      %p97 = por %p95, %p96
      %p98 = scmp.ne.s32.totalorder %s90, %s92
      %p99 = scmp.eq.s32.totalorder %s35, 3
      %p100 = por %p98, %p99
      %p101 = scmp.ne.s32.totalorder %s92, %s93
      %p102 = scmp.eq.s32.totalorder %s35, 0
      %p103 = por %p101, %p102
      %p104 = scmp.ne.s32.totalorder %s92, %s93
      %p105 = scmp.eq.s32.totalorder %s36, 3
      %p106 = por %p104, %p105
      %p108 = scmp.ne.s32.totalorder %s93, %s107
      %p109 = scmp.eq.s32.totalorder %s36, 0
      %p110 = por %p108, %p109
      %s112 = sadd.s32 %s111, 1
      %p115 = scmp.eq.s32.totalorder %s30, 3
      %p116 = scmp.ne.s32.totalorder %s111, %s113
      %p117 = scmp.eq.s32.totalorder %s30, 0
      %p118 = por %p116, %p117
      %p119 = scmp.ne.s32.totalorder %s111, %s113
      %p120 = scmp.eq.s32.totalorder %s35, 3
      %p121 = por %p119, %p120
      %p122 = scmp.ne.s32.totalorder %s113, %s114
      %p123 = scmp.eq.s32.totalorder %s35, 0
      %p124 = por %p122, %p123
      %p125 = scmp.ne.s32.totalorder %s113, %s114
      %p126 = scmp.eq.s32.totalorder %s36, 3
      %p127 = por %p125, %p126
      %p129 = scmp.ne.s32.totalorder %s114, %s128
      %p130 = scmp.eq.s32.totalorder %s36, 0
      %p131 = por %p129, %p130
      %s133 = sadd.s32 %s132, 1
      %p136 = scmp.eq.s32.totalorder %s30, 3
      %p137 = scmp.ne.s32.totalorder %s132, %s134
      %p138 = scmp.eq.s32.totalorder %s30, 0
      %p139 = por %p137, %p138
      %p140 = scmp.ne.s32.totalorder %s132, %s134
      %p141 = scmp.eq.s32.totalorder %s35, 3
      %p142 = por %p140, %p141
      %p143 = scmp.ne.s32.totalorder %s134, %s135
      %p144 = scmp.eq.s32.totalorder %s35, 0
      %p145 = por %p143, %p144
      %p146 = scmp.ne.s32.totalorder %s134, %s135
      %p147 = scmp.eq.s32.totalorder %s36, 3
      %p148 = por %p146, %p147
      %p150 = scmp.ne.s32.totalorder %s135, %s149
      %p151 = scmp.eq.s32.totalorder %s36, 0
      %p152 = por %p150, %p151
      %s154 = sadd.s32 %s153, 1
      %p157 = scmp.eq.s32.totalorder %s30, 3
      %p158 = scmp.ne.s32.totalorder %s153, %s155
      %p159 = scmp.eq.s32.totalorder %s30, 0
      %p160 = por %p158, %p159
      %p161 = scmp.ne.s32.totalorder %s153, %s155
      %p162 = scmp.eq.s32.totalorder %s35, 3
      %p163 = por %p161, %p162
      %p164 = scmp.ne.s32.totalorder %s155, %s156
      %p165 = scmp.eq.s32.totalorder %s35, 0
      %p166 = por %p164, %p165
      %p167 = scmp.ne.s32.totalorder %s155, %s156
      %p168 = scmp.eq.s32.totalorder %s36, 3
      %p169 = por %p167, %p168
      %p171 = scmp.ne.s32.totalorder %s156, %s170
      %p172 = scmp.eq.s32.totalorder %s36, 0
      %p173 = por %p171, %p172
      %s175 = sadd.s32 %s174, 1
      %p178 = scmp.eq.s32.totalorder %s30, 3
      %p179 = scmp.ne.s32.totalorder %s174, %s176
      %p180 = scmp.eq.s32.totalorder %s30, 0
      %p181 = por %p179, %p180
      %p182 = scmp.ne.s32.totalorder %s174, %s176
      %p183 = scmp.eq.s32.totalorder %s35, 3
      %p184 = por %p182, %p183
      %p185 = scmp.ne.s32.totalorder %s176, %s177
      %p186 = scmp.eq.s32.totalorder %s35, 0
      %p187 = por %p185, %p186
      %p188 = scmp.ne.s32.totalorder %s176, %s177
      %p189 = scmp.eq.s32.totalorder %s36, 3
      %p190 = por %p188, %p189
      %p192 = scmp.ne.s32.totalorder %s177, %s191
      %p193 = scmp.eq.s32.totalorder %s36, 0
      %p194 = por %p192, %p193
      %s196 = sadd.s32 %s195, 1
      %p199 = scmp.eq.s32.totalorder %s30, 3
      %p200 = scmp.ne.s32.totalorder %s195, %s197
      %p201 = scmp.eq.s32.totalorder %s30, 0
      %p202 = por %p200, %p201
      %p203 = scmp.ne.s32.totalorder %s195, %s197
      %p204 = scmp.eq.s32.totalorder %s35, 3
      %p205 = por %p203, %p204
      %p206 = scmp.ne.s32.totalorder %s197, %s198
      %p207 = scmp.eq.s32.totalorder %s35, 0
      %p208 = por %p206, %p207
      %p209 = scmp.ne.s32.totalorder %s197, %s198
      %p210 = scmp.eq.s32.totalorder %s36, 3
      %p211 = por %p209, %p210
      %p213 = scmp.ne.s32.totalorder %s198, %s212
      %p214 = scmp.eq.s32.totalorder %s36, 0
      %p215 = por %p213, %p214
      %s217 = sadd.s32 %s216, 1
      %p220 = scmp.eq.s32.totalorder %s30, 3
      %p221 = scmp.ne.s32.totalorder %s216, %s218
      %p222 = scmp.eq.s32.totalorder %s30, 0
      %p223 = por %p221, %p222
      %p224 = scmp.ne.s32.totalorder %s216, %s218
      %p225 = scmp.eq.s32.totalorder %s35, 3
      %p226 = por %p224, %p225
      %p227 = scmp.ne.s32.totalorder %s218, %s219
      %p228 = scmp.eq.s32.totalorder %s35, 0
      %p229 = por %p227, %p228
      %p230 = scmp.ne.s32.totalorder %s218, %s219
      %p231 = scmp.eq.s32.totalorder %s36, 3
      %p232 = por %p230, %p231
      %p234 = scmp.ne.s32.totalorder %s219, %s233
      %p235 = scmp.eq.s32.totalorder %s36, 0
      %p236 = por %p234, %p235
      %s238 = sadd.s32 %s237, 1
      %p241 = scmp.eq.s32.totalorder %s30, 3
      %p242 = scmp.ne.s32.totalorder %s237, %s239
      %p243 = scmp.eq.s32.totalorder %s30, 0
      %p244 = por %p242, %p243
      %p245 = scmp.ne.s32.totalorder %s237, %s239
      %p246 = scmp.eq.s32.totalorder %s35, 3
      %p247 = por %p245, %p246
      %p248 = scmp.ne.s32.totalorder %s239, %s240
      %p249 = scmp.eq.s32.totalorder %s35, 0
      %p250 = por %p248, %p249
      %p251 = scmp.ne.s32.totalorder %s239, %s240
      %p252 = scmp.eq.s32.totalorder %s36, 3
      %p253 = por %p251, %p252
      %p255 = scmp.ne.s32.totalorder %s240, %s254
      %p256 = scmp.eq.s32.totalorder %s36, 0
      %p257 = por %p255, %p256
      %s259 = sadd.s32 %s258, 1
      %p262 = scmp.eq.s32.totalorder %s30, 3
      %p263 = scmp.ne.s32.totalorder %s258, %s260
      %p264 = scmp.eq.s32.totalorder %s30, 0
      %p265 = por %p263, %p264
      %p266 = scmp.ne.s32.totalorder %s258, %s260
      %p267 = scmp.eq.s32.totalorder %s35, 3
      %p268 = por %p266, %p267
      %p269 = scmp.ne.s32.totalorder %s260, %s261
      %p270 = scmp.eq.s32.totalorder %s35, 0
      %p271 = por %p269, %p270
      %p272 = scmp.ne.s32.totalorder %s260, %s261
      %p273 = scmp.eq.s32.totalorder %s36, 3
      %p274 = por %p272, %p273
      %p276 = scmp.ne.s32.totalorder %s261, %s275
      %p277 = scmp.eq.s32.totalorder %s36, 0
      %p278 = por %p276, %p277
      %s279 = ssub.s32 %s30, %s37
      %p280 = scmp.eq.s32.totalorder %s279, 0
      %s282 = sadd.s32 %s281, 1
      %s283 = scalar_select %p280, %s281, %s282
      %p286 = pneg %p280
      %p287 = scmp.eq.s32.totalorder %s30, 3
      %p288 = por %p286, %p287
      %p289 = scmp.ne.s32.totalorder %s281, %s284
      %p290 = scmp.eq.s32.totalorder %s30, 0
      %p291 = por %p289, %p290
      %p292 = scmp.ne.s32.totalorder %s281, %s284
      %p293 = scmp.eq.s32.totalorder %s35, 3
      %p294 = por %p292, %p293
      %p295 = scmp.ne.s32.totalorder %s284, %s285
      %p296 = scmp.eq.s32.totalorder %s35, 0
      %p297 = por %p295, %p296
      %p298 = scmp.ne.s32.totalorder %s284, %s285
      %p299 = scmp.eq.s32.totalorder %s36, 3
      %p300 = por %p298, %p299
      %p302 = scmp.ne.s32.totalorder %s285, %s301
      %p303 = scmp.eq.s32.totalorder %s36, 0
      %p304 = por %p302, %p303
      %p305 = scmp.le.s32.totalorder 1, %s30
      %p306 = scmp.lt.s32.totalorder %s30, 5
      %p307 = pnand %p305, %p306
      %p308 = pneg %p307
      // Predicated region
      $region9: #{tpu_custom_call.1} parent=5 // pred_check
        _
      $region10: #{tpu_custom_call.1} parent=5 // pred_check_branch
        %310 = sbr.rel (%p307) target = $region12
      $region11: #{tpu_custom_call.1} parent=5 // pred_region
        %s311 = ssub.s32 %s30, 1
        // Predicated region
        $region13: #{tpu_custom_call.1} parent=11 // pred_check
          %p312 = pneg %p103
        $region14: #{tpu_custom_call.1} parent=11 // pred_check_branch
          %314 = sbr.rel (%p312) target = $region16
        $region15: #{tpu_custom_call.1} parent=11 // pred_region
          %316 = vsyncadd [#allocation7], 0
          %s317 = sshll.u32 %s2, 4
          %s318 = int_to_ptr.hbm [resolvable:$true] %s317
          %s319 = sshll.u32 [#allocation8], 4
          %s320 = int_to_ptr.vmem [resolvable:$true] %s319
          %325 = dma.hbm_to_vmem [thread:$0]  %s318, 1024, %s320, [#allocation7], 64, 64, 4
        $region16: #{tpu_custom_call.1} parent=11 // pred_fallthru
          _
        // Predicated region
        $region17: #{tpu_custom_call.1} parent=11 // pred_check
          %p326 = pneg %p124
        $region18: #{tpu_custom_call.1} parent=11 // pred_check_branch
          %328 = sbr.rel (%p326) target = $region20
        $region19: #{tpu_custom_call.1} parent=11 // pred_region
          %330 = vsyncadd [#allocation10], 0
          %s331 = sshll.u32 %s3, 4
          %s332 = int_to_ptr.hbm [resolvable:$true] %s331
          %s333 = sshll.u32 [#allocation9], 4
          %s334 = int_to_ptr.vmem [resolvable:$true] %s333
          %339 = dma.hbm_to_vmem [thread:$0]  %s332, 1024, %s334, [#allocation10], 64, 64, 4
        $region20: #{tpu_custom_call.1} parent=11 // pred_fallthru
          _
        // Predicated region
        $region21: #{tpu_custom_call.1} parent=11 // pred_check
          %p340 = pneg %p145
        $region22: #{tpu_custom_call.1} parent=11 // pred_check_branch
          %342 = sbr.rel (%p340) target = $region24
        $region23: #{tpu_custom_call.1} parent=11 // pred_region
          _
        $region24: #{tpu_custom_call.1} parent=11 // pred_fallthru
          _
        // Predicated region
        $region25: #{tpu_custom_call.1} parent=11 // pred_check
          %p343 = pneg %p166
        $region26: #{tpu_custom_call.1} parent=11 // pred_check_branch
          %345 = sbr.rel (%p343) target = $region28
        $region27: #{tpu_custom_call.1} parent=11 // pred_region
          %347 = vsyncadd [#allocation10], 0
          %s348 = sshll.u32 %s5, 4
          %s349 = int_to_ptr.hbm [resolvable:$true] %s348
          %s350 = sshll.u32 [#allocation11], 4
          %s351 = int_to_ptr.vmem [resolvable:$true] %s350
          %356 = dma.hbm_to_vmem [thread:$0]  %s349, 1024, %s351, [#allocation10], 64, 64, 4
        $region28: #{tpu_custom_call.1} parent=11 // pred_fallthru
          _
        // Predicated region
        $region29: #{tpu_custom_call.1} parent=11 // pred_check
          %p357 = pneg %p187
        $region30: #{tpu_custom_call.1} parent=11 // pred_check_branch
          %359 = sbr.rel (%p357) target = $region32
        $region31: #{tpu_custom_call.1} parent=11 // pred_region
          _
        $region32: #{tpu_custom_call.1} parent=11 // pred_fallthru
          _
        // Predicated region
        $region33: #{tpu_custom_call.1} parent=11 // pred_check
          %p360 = pneg %p208
        $region34: #{tpu_custom_call.1} parent=11 // pred_check_branch
          %362 = sbr.rel (%p360) target = $region36
        $region35: #{tpu_custom_call.1} parent=11 // pred_region
          %364 = vsyncadd [#allocation13], 0
          %s365 = sshll.u32 %s7, 4
          %s366 = int_to_ptr.hbm [resolvable:$true] %s365
          %s367 = sshll.u32 [#allocation12], 4
          %s368 = int_to_ptr.vmem [resolvable:$true] %s367
          %373 = dma.hbm_to_vmem [thread:$0]  %s366, 1024, %s368, [#allocation13], 64, 64, 4
        $region36: #{tpu_custom_call.1} parent=11 // pred_fallthru
          _
        // Predicated region
        $region37: #{tpu_custom_call.1} parent=11 // pred_check
          %p374 = pneg %p229
        $region38: #{tpu_custom_call.1} parent=11 // pred_check_branch
          %376 = sbr.rel (%p374) target = $region40
        $region39: #{tpu_custom_call.1} parent=11 // pred_region
          _
        $region40: #{tpu_custom_call.1} parent=11 // pred_fallthru
          _
        // Predicated region
        $region41: #{tpu_custom_call.1} parent=11 // pred_check
          %p377 = pneg %p250
        $region42: #{tpu_custom_call.1} parent=11 // pred_check_branch
          %379 = sbr.rel (%p377) target = $region44
        $region43: #{tpu_custom_call.1} parent=11 // pred_region
          _
        $region44: #{tpu_custom_call.1} parent=11 // pred_fallthru
          _
        // Predicated region
        $region45: #{tpu_custom_call.1} parent=11 // pred_check
          %p380 = pneg %p271
        $region46: #{tpu_custom_call.1} parent=11 // pred_check_branch
          %382 = sbr.rel (%p380) target = $region48
        $region47: #{tpu_custom_call.1} parent=11 // pred_region
          _
        $region48: #{tpu_custom_call.1} parent=11 // pred_fallthru
          _
      $region12: #{tpu_custom_call.1} parent=5 // pred_fallthru
        _
      %p383 = scmp.lt.s32.totalorder %s30, 4
      // Predicated region
      $region49: #{tpu_custom_call.1} parent=5 // pred_check
        %p384 = pneg %p383
      $region50: #{tpu_custom_call.1} parent=5 // pred_check_branch
        %386 = sbr.rel (%p384) target = $region52
      $region51: #{tpu_custom_call.1} parent=5 // pred_region
        // Predicated region
        $region53: #{tpu_custom_call.1} parent=51 // pred_check
          %p387 = pneg %p50
        $region54: #{tpu_custom_call.1} parent=51 // pred_check_branch
          %389 = sbr.rel (%p387) target = $region56
        $region55: #{tpu_custom_call.1} parent=51 // pred_region
          %s390 = sand.u32 %s40, 1
          %s391 = scalar_lea.sflag [#allocation4], %s390
          %s392 = sand.u32 %s40, 1
          %s393 = smul.addr %s392, 128
          %s394 = scalar_lea.vmem [#allocation3], %s393
          %s395 = smul.u32 16, %s30
          %397 = vsyncadd %s391, 0
          %s398 = smul.addr %s395, 8
          %s399 = scalar_lea.hbm %s0, %s398
          %s400 = sshll.u32 %s399, 4
          %s401 = int_to_ptr.hbm [resolvable:$true] %s400
          %s402 = sshll.u32 %s394, 4
          %s403 = int_to_ptr.vmem [resolvable:$true] %s402
          %408 = dma.hbm_to_vmem [thread:$0]  %s401, 2048, %s403, %s391, 128, 128, 8
        $region56: #{tpu_custom_call.1} parent=51 // pred_fallthru
          _
        // Predicated region
        $region57: #{tpu_custom_call.1} parent=51 // pred_check
          %p409 = pneg %p76
        $region58: #{tpu_custom_call.1} parent=51 // pred_check_branch
          %411 = sbr.rel (%p409) target = $region60
        $region59: #{tpu_custom_call.1} parent=51 // pred_region
          %s412 = sand.u32 %s30, 1
          %s413 = scalar_lea.sflag [#allocation7], %s412
          %s414 = sand.u32 %s66, 1
          %s415 = smul.addr %s414, 128
          %s416 = scalar_lea.vmem [#allocation6], %s415
          %s417 = smul.u32 16, %s30
          %419 = vsyncadd %s413, 0
          %s420 = smul.addr %s417, 8
          %s421 = scalar_lea.hbm %s1, %s420
          %s422 = sshll.u32 %s421, 4
          %s423 = int_to_ptr.hbm [resolvable:$true] %s422
          %s424 = sshll.u32 %s416, 4
          %s425 = int_to_ptr.vmem [resolvable:$true] %s424
          %430 = dma.hbm_to_vmem [thread:$0]  %s423, 2048, %s425, %s413, 128, 128, 8
        $region60: #{tpu_custom_call.1} parent=51 // pred_fallthru
          _
      $region52: #{tpu_custom_call.1} parent=5 // pred_fallthru
        _
      %p431 = scmp.le.s32.totalorder 1, %s30
      %p432 = scmp.lt.s32.totalorder %s30, 5
      %p433 = pnand %p431, %p432
      %p434 = pneg %p433
      // Predicated region
      $region61: #{tpu_custom_call.1} parent=5 // pred_check
        _
      $region62: #{tpu_custom_call.1} parent=5 // pred_check_branch
        %436 = sbr.rel (%p433) target = $region64
      $region63: #{tpu_custom_call.1} parent=5 // pred_region
        %s437 = ssub.s32 %s30, 1
        %s438 = sand.u32 %s43, 1
        %s439 = scalar_lea.sflag [#allocation4], %s438
        %s440 = sand.u32 %s43, 1
        %s441 = smul.addr %s440, 128
        %s442 = scalar_lea.vmem [#allocation3], %s441
        // Predicated region
        $region65: #{tpu_custom_call.1} parent=63 // pred_check
          %p443 = pneg %p56
        $region66: #{tpu_custom_call.1} parent=63 // pred_check_branch
          %445 = sbr.rel (%p443) target = $region68
        $region67: #{tpu_custom_call.1} parent=63 // pred_region
          %447 = dma.done %s439, 2048
        $region68: #{tpu_custom_call.1} parent=63 // pred_fallthru
          _
        %s448 = sand.u32 %s35, 1
        %s449 = scalar_lea.sflag [#allocation7], %s448
        %s450 = sand.u32 %s69, 1
        %s451 = smul.addr %s450, 128
        %s452 = scalar_lea.vmem [#allocation6], %s451
        // Predicated region
        $region69: #{tpu_custom_call.1} parent=63 // pred_check
          %p453 = pneg %p82
        $region70: #{tpu_custom_call.1} parent=63 // pred_check_branch
          %455 = sbr.rel (%p453) target = $region72
        $region71: #{tpu_custom_call.1} parent=63 // pred_region
          %457 = dma.done %s449, 2048
        $region72: #{tpu_custom_call.1} parent=63 // pred_fallthru
          _
        // Predicated region
        $region73: #{tpu_custom_call.1} parent=63 // pred_check
          %p458 = pneg %p103
        $region74: #{tpu_custom_call.1} parent=63 // pred_check_branch
          %460 = sbr.rel (%p458) target = $region76
        $region75: #{tpu_custom_call.1} parent=63 // pred_region
          %462 = dma.done [#allocation7], 1024
        $region76: #{tpu_custom_call.1} parent=63 // pred_fallthru
          _
        // Predicated region
        $region77: #{tpu_custom_call.1} parent=63 // pred_check
          %p463 = pneg %p124
        $region78: #{tpu_custom_call.1} parent=63 // pred_check_branch
          %465 = sbr.rel (%p463) target = $region80
        $region79: #{tpu_custom_call.1} parent=63 // pred_region
          %467 = dma.done [#allocation10], 1024
        $region80: #{tpu_custom_call.1} parent=63 // pred_fallthru
          _
        // Predicated region
        $region81: #{tpu_custom_call.1} parent=63 // pred_check
          %p468 = pneg %p166
        $region82: #{tpu_custom_call.1} parent=63 // pred_check_branch
          %470 = sbr.rel (%p468) target = $region84
        $region83: #{tpu_custom_call.1} parent=63 // pred_region
          %472 = dma.done [#allocation10], 1024
        $region84: #{tpu_custom_call.1} parent=63 // pred_fallthru
          _
        // Predicated region
        $region85: #{tpu_custom_call.1} parent=63 // pred_check
          %p473 = pneg %p208
        $region86: #{tpu_custom_call.1} parent=63 // pred_check_branch
          %475 = sbr.rel (%p473) target = $region88
        $region87: #{tpu_custom_call.1} parent=63 // pred_region
          %477 = dma.done [#allocation13], 1024
        $region88: #{tpu_custom_call.1} parent=63 // pred_fallthru
          _
        %s478 = sand.u32 %s43, 1
        %s479 = scalar_lea.sflag [#allocation4], %s478
        %s480 = sand.u32 %s43, 1
        %s481 = smul.addr %s480, 128
        %s482 = scalar_lea.vmem [#allocation3], %s481
        %p483 = pneg %p56
        %p484 = pneg %p53
        %s485 = sand.u32 %s35, 1
        %s486 = scalar_lea.sflag [#allocation7], %s485
        %s487 = sand.u32 %s69, 1
        %s488 = smul.addr %s487, 128
        %s489 = scalar_lea.vmem [#allocation6], %s488
        %p490 = pneg %p82
        %p491 = pneg %p79
        %p492 = pneg %p103
        %p493 = pneg %p100
        %p494 = pneg %p124
        %p495 = pneg %p121
        %p496 = pneg %p145
        %p497 = pneg %p142
        %p498 = pneg %p166
        %p499 = pneg %p163
        %p500 = pneg %p187
        %p501 = pneg %p184
        %p502 = pneg %p208
        %p503 = pneg %p205
        %p504 = pneg %p229
        %p505 = pneg %p226
        %p506 = pneg %p250
        %p507 = pneg %p247
        %p508 = pneg %p271
        %p509 = pneg %p268
        %p510 = pneg %p297
        %p511 = pneg %p294
        %s512 = sand.u32 %s284, 1
        %s513 = scalar_lea.sflag [#allocation5], %s512
        %s514 = sand.u32 %s284, 1
        %s515 = scalar_lea.vmem [#allocation14], %s514
        %s516 = smul.u32 16, %s35
        %s517 = smul.u32 16, %s35
        %v518 = vld [vmem:[%s442] sm:$0xff]
        %v519 = vld [vmem:[%s442 + $0x8] sm:$0xff]
        %v520 = vld [vmem:[%s442 + $0x10] sm:$0xff]
        %v521 = vld [vmem:[%s442 + $0x18] sm:$0xff]
        %v522 = vld [vmem:[%s442 + $0x20] sm:$0xff]
        %v523 = vld [vmem:[%s442 + $0x28] sm:$0xff]
        %v524 = vld [vmem:[%s442 + $0x30] sm:$0xff]
        %v525 = vld [vmem:[%s442 + $0x38] sm:$0xff]
        %v526 = vld [vmem:[%s442 + $0x40] sm:$0xff]
        %v527 = vld [vmem:[%s442 + $0x48] sm:$0xff]
        %v528 = vld [vmem:[%s442 + $0x50] sm:$0xff]
        %v529 = vld [vmem:[%s442 + $0x58] sm:$0xff]
        %v530 = vld [vmem:[%s442 + $0x60] sm:$0xff]
        %v531 = vld [vmem:[%s442 + $0x68] sm:$0xff]
        %v532 = vld [vmem:[%s442 + $0x70] sm:$0xff]
        %v533 = vld [vmem:[%s442 + $0x78] sm:$0xff]
        %v534 = vpack.c.bf16 %v519, %v518
        %v535 = vpack.c.bf16 %v521, %v520
        %v536 = vpack.c.bf16 %v523, %v522
        %v537 = vpack.c.bf16 %v525, %v524
        %v538 = vpack.c.bf16 %v527, %v526
        %v539 = vpack.c.bf16 %v529, %v528
        %v540 = vpack.c.bf16 %v531, %v530
        %v541 = vpack.c.bf16 %v533, %v532
        %v542 = vld [vmem:[%s452] sm:$0xff]
        %v543 = vld [vmem:[%s452 + $0x8] sm:$0xff]
        %v544 = vld [vmem:[%s452 + $0x10] sm:$0xff]
        %v545 = vld [vmem:[%s452 + $0x18] sm:$0xff]
        %v546 = vld [vmem:[%s452 + $0x20] sm:$0xff]
        %v547 = vld [vmem:[%s452 + $0x28] sm:$0xff]
        %v548 = vld [vmem:[%s452 + $0x30] sm:$0xff]
        %v549 = vld [vmem:[%s452 + $0x38] sm:$0xff]
        %v550 = vld [vmem:[%s452 + $0x40] sm:$0xff]
        %v551 = vld [vmem:[%s452 + $0x48] sm:$0xff]
        %v552 = vld [vmem:[%s452 + $0x50] sm:$0xff]
        %v553 = vld [vmem:[%s452 + $0x58] sm:$0xff]
        %v554 = vld [vmem:[%s452 + $0x60] sm:$0xff]
        %v555 = vld [vmem:[%s452 + $0x68] sm:$0xff]
        %v556 = vld [vmem:[%s452 + $0x70] sm:$0xff]
        %v557 = vld [vmem:[%s452 + $0x78] sm:$0xff]
        %v558 = vpack.c.bf16 %v543, %v542
        %v559 = vpack.c.bf16 %v545, %v544
        %v560 = vpack.c.bf16 %v547, %v546
        %v561 = vpack.c.bf16 %v549, %v548
        %v562 = vpack.c.bf16 %v551, %v550
        %v563 = vpack.c.bf16 %v553, %v552
        %v564 = vpack.c.bf16 %v555, %v554
        %v565 = vpack.c.bf16 %v557, %v556
        %v566 = vld [vmem:[#allocation8] sm:$0xf]
        %v567 = vld [vmem:[#allocation8 + $0x4] sm:$0xf]
        %v568 = vld [vmem:[#allocation8 + $0x8] sm:$0xf]
        %v569 = vld [vmem:[#allocation8 + $0xc] sm:$0xf]
        %v570 = vld [vmem:[#allocation8 + $0x10] sm:$0xf]
        %v571 = vld [vmem:[#allocation8 + $0x14] sm:$0xf]
        %v572 = vld [vmem:[#allocation8 + $0x18] sm:$0xf]
        %v573 = vld [vmem:[#allocation8 + $0x1c] sm:$0xf]
        %v574 = vld [vmem:[#allocation8 + $0x20] sm:$0xf]
        %v575 = vld [vmem:[#allocation8 + $0x24] sm:$0xf]
        %v576 = vld [vmem:[#allocation8 + $0x28] sm:$0xf]
        %v577 = vld [vmem:[#allocation8 + $0x2c] sm:$0xf]
        %v578 = vld [vmem:[#allocation8 + $0x30] sm:$0xf]
        %v579 = vld [vmem:[#allocation8 + $0x34] sm:$0xf]
        %v580 = vld [vmem:[#allocation8 + $0x38] sm:$0xf]
        %v581 = vld [vmem:[#allocation8 + $0x3c] sm:$0xf]
        %v582 = vld [vmem:[#allocation9] sm:$0xf]
        %v583 = vld [vmem:[#allocation9 + $0x4] sm:$0xf]
        %v584 = vld [vmem:[#allocation9 + $0x8] sm:$0xf]
        %v585 = vld [vmem:[#allocation9 + $0xc] sm:$0xf]
        %v586 = vld [vmem:[#allocation9 + $0x10] sm:$0xf]
        %v587 = vld [vmem:[#allocation9 + $0x14] sm:$0xf]
        %v588 = vld [vmem:[#allocation9 + $0x18] sm:$0xf]
        %v589 = vld [vmem:[#allocation9 + $0x1c] sm:$0xf]
        %v590 = vld [vmem:[#allocation9 + $0x20] sm:$0xf]
        %v591 = vld [vmem:[#allocation9 + $0x24] sm:$0xf]
        %v592 = vld [vmem:[#allocation9 + $0x28] sm:$0xf]
        %v593 = vld [vmem:[#allocation9 + $0x2c] sm:$0xf]
        %v594 = vld [vmem:[#allocation9 + $0x30] sm:$0xf]
        %v595 = vld [vmem:[#allocation9 + $0x34] sm:$0xf]
        %v596 = vld [vmem:[#allocation9 + $0x38] sm:$0xf]
        %v597 = vld [vmem:[#allocation9 + $0x3c] sm:$0xf]
        %v614 = vunpack.c.l.b16 %v582
        %v615 = vunpack.c.l.b16 %v583
        %v616 = vunpack.c.l.b16 %v584
        %v617 = vunpack.c.l.b16 %v585
        %v618 = vunpack.c.l.b16 %v586
        %v619 = vunpack.c.l.b16 %v587
        %v620 = vunpack.c.l.b16 %v588
        %v621 = vunpack.c.l.b16 %v589
        %v622 = vunpack.c.l.b16 %v590
        %v623 = vunpack.c.l.b16 %v591
        %v624 = vunpack.c.l.b16 %v592
        %v625 = vunpack.c.l.b16 %v593
        %v626 = vunpack.c.l.b16 %v594
        %v627 = vunpack.c.l.b16 %v595
        %v628 = vunpack.c.l.b16 %v596
        %v629 = vunpack.c.l.b16 %v597
        %v630 = vpack.c.b16 %v615, %v614
        %v631 = vpack.c.b16 %v617, %v616
        %v632 = vpack.c.b16 %v619, %v618
        %v633 = vpack.c.b16 %v621, %v620
        %v634 = vpack.c.b16 %v623, %v622
        %v635 = vpack.c.b16 %v625, %v624
        %v636 = vpack.c.b16 %v627, %v626
        %v637 = vpack.c.b16 %v629, %v628
        %646 = vmatpush.bf16.msra.mxu0 %v637
        %647 = vmatpush.bf16.msra.mxu0 %v636
        %648 = vmatpush.bf16.msra.mxu0 %v635
        %649 = vmatpush.bf16.msra.mxu0 %v634
        %650 = vmatpush.bf16.msra.mxu0 %v633
        %651 = vmatpush.bf16.msra.mxu0 %v632
        %652 = vmatpush.bf16.msra.mxu0 %v631
        %653 = vmatpush.bf16.msra.mxu0 %v630
        %654 = vmatmul.bf16.gmra.mxu0 %v558
        %v655 = vpop.f32.mrf.mxu0
        %v656 = vadd.f32 0.0, %v655
        %v657 = vpop.f32.mrf.mxu0
        %v658 = vadd.f32 0.0, %v657
        %659 = vmatmul.bf16.gmra.mxu0 %v559
        %v660 = vpop.f32.mrf.mxu0
        %v661 = vadd.f32 0.0, %v660
        %v662 = vpop.f32.mrf.mxu0
        %v663 = vadd.f32 0.0, %v662
        %664 = vmatmul.bf16.gmra.mxu0 %v560
        %v665 = vpop.f32.mrf.mxu0
        %v666 = vadd.f32 0.0, %v665
        %v667 = vpop.f32.mrf.mxu0
        %v668 = vadd.f32 0.0, %v667
        %669 = vmatmul.bf16.gmra.mxu0 %v561
        %v670 = vpop.f32.mrf.mxu0
        %v671 = vadd.f32 0.0, %v670
        %v672 = vpop.f32.mrf.mxu0
        %v673 = vadd.f32 0.0, %v672
        %674 = vmatmul.bf16.gmra.mxu0 %v562
        %v675 = vpop.f32.mrf.mxu0
        %v676 = vadd.f32 0.0, %v675
        %v677 = vpop.f32.mrf.mxu0
        %v678 = vadd.f32 0.0, %v677
        %679 = vmatmul.bf16.gmra.mxu0 %v563
        %v680 = vpop.f32.mrf.mxu0
        %v681 = vadd.f32 0.0, %v680
        %v682 = vpop.f32.mrf.mxu0
        %v683 = vadd.f32 0.0, %v682
        %684 = vmatmul.bf16.gmra.mxu0 %v564
        %v685 = vpop.f32.mrf.mxu0
        %v686 = vadd.f32 0.0, %v685
        %v687 = vpop.f32.mrf.mxu0
        %v688 = vadd.f32 0.0, %v687
        %689 = vmatmul.bf16.gmra.mxu0 %v565
        %v690 = vpop.f32.mrf.mxu0
        %v691 = vadd.f32 0.0, %v690
        %v692 = vpop.f32.mrf.mxu0
        %v693 = vadd.f32 0.0, %v692
        %694 = vdwg.mxu0
        %v711 = vunpack.c.l.b16 %v566
        %v712 = vunpack.c.l.b16 %v567
        %v713 = vunpack.c.l.b16 %v568
        %v714 = vunpack.c.l.b16 %v569
        %v715 = vunpack.c.l.b16 %v570
        %v716 = vunpack.c.l.b16 %v571
        %v717 = vunpack.c.l.b16 %v572
        %v718 = vunpack.c.l.b16 %v573
        %v719 = vunpack.c.l.b16 %v574
        %v720 = vunpack.c.l.b16 %v575
        %v721 = vunpack.c.l.b16 %v576
        %v722 = vunpack.c.l.b16 %v577
        %v723 = vunpack.c.l.b16 %v578
        %v724 = vunpack.c.l.b16 %v579
        %v725 = vunpack.c.l.b16 %v580
        %v726 = vunpack.c.l.b16 %v581
        %v727 = vpack.c.b16 %v712, %v711
        %v728 = vpack.c.b16 %v714, %v713
        %v729 = vpack.c.b16 %v716, %v715
        %v730 = vpack.c.b16 %v718, %v717
        %v731 = vpack.c.b16 %v720, %v719
        %v732 = vpack.c.b16 %v722, %v721
        %v733 = vpack.c.b16 %v724, %v723
        %v734 = vpack.c.b16 %v726, %v725
        %743 = vmatpush.bf16.msra.mxu0 %v734
        %744 = vmatpush.bf16.msra.mxu0 %v733
        %745 = vmatpush.bf16.msra.mxu0 %v732
        %746 = vmatpush.bf16.msra.mxu0 %v731
        %747 = vmatpush.bf16.msra.mxu0 %v730
        %748 = vmatpush.bf16.msra.mxu0 %v729
        %749 = vmatpush.bf16.msra.mxu0 %v728
        %750 = vmatpush.bf16.msra.mxu0 %v727
        %751 = vmatmul.bf16.gmra.mxu0 %v534
        %v752 = vpop.f32.mrf.mxu0
        %v753 = vadd.f32 %v656, %v752
        %v754 = vpop.f32.mrf.mxu0
        %v755 = vadd.f32 %v658, %v754
        %756 = vmatmul.bf16.gmra.mxu0 %v535
        %v757 = vpop.f32.mrf.mxu0
        %v758 = vadd.f32 %v661, %v757
        %v759 = vpop.f32.mrf.mxu0
        %v760 = vadd.f32 %v663, %v759
        %761 = vmatmul.bf16.gmra.mxu0 %v536
        %v762 = vpop.f32.mrf.mxu0
        %v763 = vadd.f32 %v666, %v762
        %v764 = vpop.f32.mrf.mxu0
        %v765 = vadd.f32 %v668, %v764
        %766 = vmatmul.bf16.gmra.mxu0 %v537
        %v767 = vpop.f32.mrf.mxu0
        %v768 = vadd.f32 %v671, %v767
        %v769 = vpop.f32.mrf.mxu0
        %v770 = vadd.f32 %v673, %v769
        %771 = vmatmul.bf16.gmra.mxu0 %v538
        %v772 = vpop.f32.mrf.mxu0
        %v773 = vadd.f32 %v676, %v772
        %v774 = vpop.f32.mrf.mxu0
        %v775 = vadd.f32 %v678, %v774
        %776 = vmatmul.bf16.gmra.mxu0 %v539
        %v777 = vpop.f32.mrf.mxu0
        %v778 = vadd.f32 %v681, %v777
        %v779 = vpop.f32.mrf.mxu0
        %v780 = vadd.f32 %v683, %v779
        %781 = vmatmul.bf16.gmra.mxu0 %v540
        %v782 = vpop.f32.mrf.mxu0
        %v783 = vadd.f32 %v686, %v782
        %v784 = vpop.f32.mrf.mxu0
        %v785 = vadd.f32 %v688, %v784
        %786 = vmatmul.bf16.gmra.mxu0 %v541
        %v787 = vpop.f32.mrf.mxu0
        %v788 = vadd.f32 %v691, %v787
        %v789 = vpop.f32.mrf.mxu0
        %v790 = vadd.f32 %v693, %v789
        %791 = vdwg.mxu0
        %v792 = vld [vmem:[%s4] sm:$0x1]
        %v794 = vperm.slane %v792, 0
        %v796 = vadd.f32 %v753, %v794
        %v797 = vadd.f32 %v755, %v794
        %v798 = vadd.f32 %v758, %v794
        %v799 = vadd.f32 %v760, %v794
        %v800 = vadd.f32 %v763, %v794
        %v801 = vadd.f32 %v765, %v794
        %v802 = vadd.f32 %v768, %v794
        %v803 = vadd.f32 %v770, %v794
        %v804 = vadd.f32 %v773, %v794
        %v805 = vadd.f32 %v775, %v794
        %v806 = vadd.f32 %v778, %v794
        %v807 = vadd.f32 %v780, %v794
        %v808 = vadd.f32 %v783, %v794
        %v809 = vadd.f32 %v785, %v794
        %v810 = vadd.f32 %v788, %v794
        %v811 = vadd.f32 %v790, %v794
        %v812 = vmax.f32 %v796, 0.0
        %v813 = vmax.f32 %v797, 0.0
        %v814 = vmax.f32 %v798, 0.0
        %v815 = vmax.f32 %v799, 0.0
        %v816 = vmax.f32 %v800, 0.0
        %v817 = vmax.f32 %v801, 0.0
        %v818 = vmax.f32 %v802, 0.0
        %v819 = vmax.f32 %v803, 0.0
        %v820 = vmax.f32 %v804, 0.0
        %v821 = vmax.f32 %v805, 0.0
        %v822 = vmax.f32 %v806, 0.0
        %v823 = vmax.f32 %v807, 0.0
        %v824 = vmax.f32 %v808, 0.0
        %v825 = vmax.f32 %v809, 0.0
        %v826 = vmax.f32 %v810, 0.0
        %v827 = vmax.f32 %v811, 0.0
        %v828 = vld [vmem:[#allocation11] sm:$0xf]
        %v829 = vld [vmem:[#allocation11 + $0x4] sm:$0xf]
        %v830 = vld [vmem:[#allocation11 + $0x8] sm:$0xf]
        %v831 = vld [vmem:[#allocation11 + $0xc] sm:$0xf]
        %v832 = vld [vmem:[#allocation11 + $0x10] sm:$0xf]
        %v833 = vld [vmem:[#allocation11 + $0x14] sm:$0xf]
        %v834 = vld [vmem:[#allocation11 + $0x18] sm:$0xf]
        %v835 = vld [vmem:[#allocation11 + $0x1c] sm:$0xf]
        %v836 = vld [vmem:[#allocation11 + $0x20] sm:$0xf]
        %v837 = vld [vmem:[#allocation11 + $0x24] sm:$0xf]
        %v838 = vld [vmem:[#allocation11 + $0x28] sm:$0xf]
        %v839 = vld [vmem:[#allocation11 + $0x2c] sm:$0xf]
        %v840 = vld [vmem:[#allocation11 + $0x30] sm:$0xf]
        %v841 = vld [vmem:[#allocation11 + $0x34] sm:$0xf]
        %v842 = vld [vmem:[#allocation11 + $0x38] sm:$0xf]
        %v843 = vld [vmem:[#allocation11 + $0x3c] sm:$0xf]
        %v844 = vld [vmem:[%s6] sm:$0x1]
        %v845 = vpack.c.bf16 %v813, %v812
        %v846 = vpack.c.bf16 %v815, %v814
        %v847 = vpack.c.bf16 %v817, %v816
        %v848 = vpack.c.bf16 %v819, %v818
        %v849 = vpack.c.bf16 %v821, %v820
        %v850 = vpack.c.bf16 %v823, %v822
        %v851 = vpack.c.bf16 %v825, %v824
        %v852 = vpack.c.bf16 %v827, %v826
        %v854 = vperm.slane %v844, 0
        %v872 = vunpack.c.l.b16 %v828
        %v873 = vunpack.c.l.b16 %v829
        %v874 = vunpack.c.l.b16 %v830
        %v875 = vunpack.c.l.b16 %v831
        %v876 = vunpack.c.l.b16 %v832
        %v877 = vunpack.c.l.b16 %v833
        %v878 = vunpack.c.l.b16 %v834
        %v879 = vunpack.c.l.b16 %v835
        %v880 = vunpack.c.l.b16 %v836
        %v881 = vunpack.c.l.b16 %v837
        %v882 = vunpack.c.l.b16 %v838
        %v883 = vunpack.c.l.b16 %v839
        %v884 = vunpack.c.l.b16 %v840
        %v885 = vunpack.c.l.b16 %v841
        %v886 = vunpack.c.l.b16 %v842
        %v887 = vunpack.c.l.b16 %v843
        %v888 = vpack.c.b16 %v873, %v872
        %v889 = vpack.c.b16 %v875, %v874
        %v890 = vpack.c.b16 %v877, %v876
        %v891 = vpack.c.b16 %v879, %v878
        %v892 = vpack.c.b16 %v881, %v880
        %v893 = vpack.c.b16 %v883, %v882
        %v894 = vpack.c.b16 %v885, %v884
        %v895 = vpack.c.b16 %v887, %v886
        %904 = vmatpush.bf16.msra.mxu0 %v895
        %905 = vmatpush.bf16.msra.mxu0 %v894
        %906 = vmatpush.bf16.msra.mxu0 %v893
        %907 = vmatpush.bf16.msra.mxu0 %v892
        %908 = vmatpush.bf16.msra.mxu0 %v891
        %909 = vmatpush.bf16.msra.mxu0 %v890
        %910 = vmatpush.bf16.msra.mxu0 %v889
        %911 = vmatpush.bf16.msra.mxu0 %v888
        %912 = vmatmul.bf16.gmra.mxu0 %v845
        %v913 = vpop.f32.mrf.mxu0
        %v914 = vadd.f32 %v854, %v913
        %v915 = vpop.f32.mrf.mxu0
        %v916 = vadd.f32 %v854, %v915
        %917 = vmatmul.bf16.gmra.mxu0 %v846
        %v918 = vpop.f32.mrf.mxu0
        %v919 = vadd.f32 %v854, %v918
        %v920 = vpop.f32.mrf.mxu0
        %v921 = vadd.f32 %v854, %v920
        %922 = vmatmul.bf16.gmra.mxu0 %v847
        %v923 = vpop.f32.mrf.mxu0
        %v924 = vadd.f32 %v854, %v923
        %v925 = vpop.f32.mrf.mxu0
        %v926 = vadd.f32 %v854, %v925
        %927 = vmatmul.bf16.gmra.mxu0 %v848
        %v928 = vpop.f32.mrf.mxu0
        %v929 = vadd.f32 %v854, %v928
        %v930 = vpop.f32.mrf.mxu0
        %v931 = vadd.f32 %v854, %v930
        %932 = vmatmul.bf16.gmra.mxu0 %v849
        %v933 = vpop.f32.mrf.mxu0
        %v934 = vadd.f32 %v854, %v933
        %v935 = vpop.f32.mrf.mxu0
        %v936 = vadd.f32 %v854, %v935
        %937 = vmatmul.bf16.gmra.mxu0 %v850
        %v938 = vpop.f32.mrf.mxu0
        %v939 = vadd.f32 %v854, %v938
        %v940 = vpop.f32.mrf.mxu0
        %v941 = vadd.f32 %v854, %v940
        %942 = vmatmul.bf16.gmra.mxu0 %v851
        %v943 = vpop.f32.mrf.mxu0
        %v944 = vadd.f32 %v854, %v943
        %v945 = vpop.f32.mrf.mxu0
        %v946 = vadd.f32 %v854, %v945
        %947 = vmatmul.bf16.gmra.mxu0 %v852
        %v948 = vpop.f32.mrf.mxu0
        %v949 = vadd.f32 %v854, %v948
        %v950 = vpop.f32.mrf.mxu0
        %v951 = vadd.f32 %v854, %v950
        %952 = vdwg.mxu0
        %v953 = vadd.f32 %v914, %v812
        %v954 = vadd.f32 %v916, %v813
        %v955 = vadd.f32 %v919, %v814
        %v956 = vadd.f32 %v921, %v815
        %v957 = vadd.f32 %v924, %v816
        %v958 = vadd.f32 %v926, %v817
        %v959 = vadd.f32 %v929, %v818
        %v960 = vadd.f32 %v931, %v819
        %v961 = vadd.f32 %v934, %v820
        %v962 = vadd.f32 %v936, %v821
        %v963 = vadd.f32 %v939, %v822
        %v964 = vadd.f32 %v941, %v823
        %v965 = vadd.f32 %v944, %v824
        %v966 = vadd.f32 %v946, %v825
        %v967 = vadd.f32 %v949, %v826
        %v968 = vadd.f32 %v951, %v827
        %v969 = vmax.f32 %v953, 0.0
        %v970 = vmax.f32 %v954, 0.0
        %v971 = vmax.f32 %v955, 0.0
        %v972 = vmax.f32 %v956, 0.0
        %v973 = vmax.f32 %v957, 0.0
        %v974 = vmax.f32 %v958, 0.0
        %v975 = vmax.f32 %v959, 0.0
        %v976 = vmax.f32 %v960, 0.0
        %v977 = vmax.f32 %v961, 0.0
        %v978 = vmax.f32 %v962, 0.0
        %v979 = vmax.f32 %v963, 0.0
        %v980 = vmax.f32 %v964, 0.0
        %v981 = vmax.f32 %v965, 0.0
        %v982 = vmax.f32 %v966, 0.0
        %v983 = vmax.f32 %v967, 0.0
        %v984 = vmax.f32 %v968, 0.0
        %v985 = vld [vmem:[#allocation12] sm:$0xf]
        %v986 = vld [vmem:[#allocation12 + $0x4] sm:$0xf]
        %v987 = vld [vmem:[#allocation12 + $0x8] sm:$0xf]
        %v988 = vld [vmem:[#allocation12 + $0xc] sm:$0xf]
        %v989 = vld [vmem:[#allocation12 + $0x10] sm:$0xf]
        %v990 = vld [vmem:[#allocation12 + $0x14] sm:$0xf]
        %v991 = vld [vmem:[#allocation12 + $0x18] sm:$0xf]
        %v992 = vld [vmem:[#allocation12 + $0x1c] sm:$0xf]
        %v993 = vld [vmem:[#allocation12 + $0x20] sm:$0xf]
        %v994 = vld [vmem:[#allocation12 + $0x24] sm:$0xf]
        %v995 = vld [vmem:[#allocation12 + $0x28] sm:$0xf]
        %v996 = vld [vmem:[#allocation12 + $0x2c] sm:$0xf]
        %v997 = vld [vmem:[#allocation12 + $0x30] sm:$0xf]
        %v998 = vld [vmem:[#allocation12 + $0x34] sm:$0xf]
        %v999 = vld [vmem:[#allocation12 + $0x38] sm:$0xf]
        %v1000 = vld [vmem:[#allocation12 + $0x3c] sm:$0xf]
        %v1001 = vld [vmem:[%s8] sm:$0x1]
        %v1002 = vpack.c.bf16 %v970, %v969
        %v1003 = vpack.c.bf16 %v972, %v971
        %v1004 = vpack.c.bf16 %v974, %v973
        %v1005 = vpack.c.bf16 %v976, %v975
        %v1006 = vpack.c.bf16 %v978, %v977
        %v1007 = vpack.c.bf16 %v980, %v979
        %v1008 = vpack.c.bf16 %v982, %v981
        %v1009 = vpack.c.bf16 %v984, %v983
        %v1011 = vperm.slane %v1001, 0
        %v1029 = vunpack.c.l.b16 %v985
        %v1030 = vunpack.c.l.b16 %v986
        %v1031 = vunpack.c.l.b16 %v987
        %v1032 = vunpack.c.l.b16 %v988
        %v1033 = vunpack.c.l.b16 %v989
        %v1034 = vunpack.c.l.b16 %v990
        %v1035 = vunpack.c.l.b16 %v991
        %v1036 = vunpack.c.l.b16 %v992
        %v1037 = vunpack.c.l.b16 %v993
        %v1038 = vunpack.c.l.b16 %v994
        %v1039 = vunpack.c.l.b16 %v995
        %v1040 = vunpack.c.l.b16 %v996
        %v1041 = vunpack.c.l.b16 %v997
        %v1042 = vunpack.c.l.b16 %v998
        %v1043 = vunpack.c.l.b16 %v999
        %v1044 = vunpack.c.l.b16 %v1000
        %v1045 = vpack.c.b16 %v1030, %v1029
        %v1046 = vpack.c.b16 %v1032, %v1031
        %v1047 = vpack.c.b16 %v1034, %v1033
        %v1048 = vpack.c.b16 %v1036, %v1035
        %v1049 = vpack.c.b16 %v1038, %v1037
        %v1050 = vpack.c.b16 %v1040, %v1039
        %v1051 = vpack.c.b16 %v1042, %v1041
        %v1052 = vpack.c.b16 %v1044, %v1043
        %1061 = vmatpush.bf16.msra.mxu0 %v1052
        %1062 = vmatpush.bf16.msra.mxu0 %v1051
        %1063 = vmatpush.bf16.msra.mxu0 %v1050
        %1064 = vmatpush.bf16.msra.mxu0 %v1049
        %1065 = vmatpush.bf16.msra.mxu0 %v1048
        %1066 = vmatpush.bf16.msra.mxu0 %v1047
        %1067 = vmatpush.bf16.msra.mxu0 %v1046
        %1068 = vmatpush.bf16.msra.mxu0 %v1045
        %1069 = vmatmul.bf16.gmra.mxu0 %v1002
        %v1070 = vpop.f32.mrf.mxu0
        %v1071 = vadd.f32 %v1011, %v1070
        %v1072 = vpop.f32.mrf.mxu0
        %v1073 = vadd.f32 %v1011, %v1072
        %1074 = vmatmul.bf16.gmra.mxu0 %v1003
        %v1075 = vpop.f32.mrf.mxu0
        %v1076 = vadd.f32 %v1011, %v1075
        %v1077 = vpop.f32.mrf.mxu0
        %v1078 = vadd.f32 %v1011, %v1077
        %1079 = vmatmul.bf16.gmra.mxu0 %v1004
        %v1080 = vpop.f32.mrf.mxu0
        %v1081 = vadd.f32 %v1011, %v1080
        %v1082 = vpop.f32.mrf.mxu0
        %v1083 = vadd.f32 %v1011, %v1082
        %1084 = vmatmul.bf16.gmra.mxu0 %v1005
        %v1085 = vpop.f32.mrf.mxu0
        %v1086 = vadd.f32 %v1011, %v1085
        %v1087 = vpop.f32.mrf.mxu0
        %v1088 = vadd.f32 %v1011, %v1087
        %1089 = vmatmul.bf16.gmra.mxu0 %v1006
        %v1090 = vpop.f32.mrf.mxu0
        %v1091 = vadd.f32 %v1011, %v1090
        %v1092 = vpop.f32.mrf.mxu0
        %v1093 = vadd.f32 %v1011, %v1092
        %1094 = vmatmul.bf16.gmra.mxu0 %v1007
        %v1095 = vpop.f32.mrf.mxu0
        %v1096 = vadd.f32 %v1011, %v1095
        %v1097 = vpop.f32.mrf.mxu0
        %v1098 = vadd.f32 %v1011, %v1097
        %1099 = vmatmul.bf16.gmra.mxu0 %v1008
        %v1100 = vpop.f32.mrf.mxu0
        %v1101 = vadd.f32 %v1011, %v1100
        %v1102 = vpop.f32.mrf.mxu0
        %v1103 = vadd.f32 %v1011, %v1102
        %1104 = vmatmul.bf16.gmra.mxu0 %v1009
        %v1105 = vpop.f32.mrf.mxu0
        %v1106 = vadd.f32 %v1011, %v1105
        %v1107 = vpop.f32.mrf.mxu0
        %v1108 = vadd.f32 %v1011, %v1107
        %1109 = vdwg.mxu0
        %v1110 = vadd.f32 %v1071, %v969
        %v1111 = vadd.f32 %v1073, %v970
        %v1112 = vadd.f32 %v1076, %v971
        %v1113 = vadd.f32 %v1078, %v972
        %v1114 = vadd.f32 %v1081, %v973
        %v1115 = vadd.f32 %v1083, %v974
        %v1116 = vadd.f32 %v1086, %v975
        %v1117 = vadd.f32 %v1088, %v976
        %v1118 = vadd.f32 %v1091, %v977
        %v1119 = vadd.f32 %v1093, %v978
        %v1120 = vadd.f32 %v1096, %v979
        %v1121 = vadd.f32 %v1098, %v980
        %v1122 = vadd.f32 %v1101, %v981
        %v1123 = vadd.f32 %v1103, %v982
        %v1124 = vadd.f32 %v1106, %v983
        %v1125 = vadd.f32 %v1108, %v984
        %v1126 = vmax.f32 %v1110, 0.0
        %v1127 = vmax.f32 %v1111, 0.0
        %v1128 = vmax.f32 %v1112, 0.0
        %v1129 = vmax.f32 %v1113, 0.0
        %v1130 = vmax.f32 %v1114, 0.0
        %v1131 = vmax.f32 %v1115, 0.0
        %v1132 = vmax.f32 %v1116, 0.0
        %v1133 = vmax.f32 %v1117, 0.0
        %v1134 = vmax.f32 %v1118, 0.0
        %v1135 = vmax.f32 %v1119, 0.0
        %v1136 = vmax.f32 %v1120, 0.0
        %v1137 = vmax.f32 %v1121, 0.0
        %v1138 = vmax.f32 %v1122, 0.0
        %v1139 = vmax.f32 %v1123, 0.0
        %v1140 = vmax.f32 %v1124, 0.0
        %v1141 = vmax.f32 %v1125, 0.0
        %v1142 = vld [vmem:[%s9] sm:$0x1]
        %v1143 = vld [vmem:[#allocation2] sm:$0x1]
        %1145 = vset.pattern.permute.xlu0 0
        %1146 = vperm.xlu0 %1145, %v1143
        %v1147 = vpop.permute.xlu0 %1146
        %v1149 = vperm.slane %v1147, 0
        %1150 = vmatpush.xpose.msra.mxu0 %v1141
        %1151 = vmatpush.xpose.msra.mxu0 %v1140
        %1152 = vmatpush.xpose.msra.mxu0 %v1139
        %1153 = vmatpush.xpose.msra.mxu0 %v1138
        %1154 = vmatpush.xpose.msra.mxu0 %v1137
        %1155 = vmatpush.xpose.msra.mxu0 %v1136
        %1156 = vmatpush.xpose.msra.mxu0 %v1135
        %1157 = vmatpush.xpose.msra.mxu0 %v1134
        %1158 = vmatpush.xpose.msra.mxu0 %v1133
        %1159 = vmatpush.xpose.msra.mxu0 %v1132
        %1160 = vmatpush.xpose.msra.mxu0 %v1131
        %1161 = vmatpush.xpose.msra.mxu0 %v1130
        %1162 = vmatpush.xpose.msra.mxu0 %v1129
        %1163 = vmatpush.xpose.msra.mxu0 %v1128
        %1164 = vmatpush.xpose.msra.mxu0 %v1127
        %1165 = vmatpush.xpose.msra.mxu0 %v1126
        %1166 = vmatmul.f32.gmra.mxu0 %v1142
        %v1167 = vpop.f32.mrf.mxu0
        %v1168 = vadd.f32 %v1149, %v1167
        %1169 = vdwg.mxu0
        %1170 = vst [vmem:[%s515] sm:$0x1] %v1168
        %s1171 = sand.u32 %s284, 1
        %s1172 = scalar_lea.sflag [#allocation5], %s1171
        %s1173 = sand.u32 %s284, 1
        %s1174 = scalar_lea.vmem [#allocation14], %s1173
        // Predicated region
        $region89: #{tpu_custom_call.1} parent=63 // pred_check
          %p1175 = pneg %p294
        $region90: #{tpu_custom_call.1} parent=63 // pred_check_branch
          %1177 = sbr.rel (%p1175) target = $region92
        $region91: #{tpu_custom_call.1} parent=63 // pred_region
          %1179 = vsyncadd %s1172, 0
          %s1180 = scalar_lea.hbm %s11, %s35
          %s1182 = sshll.u32 %s1174, 4
          %s1183 = int_to_ptr.vmem [resolvable:$true] %s1182
          %s1184 = sshll.u32 %s1180, 4
          %s1185 = int_to_ptr.hbm [resolvable:$true] %s1184
          %1187 = dma.vmem_to_hbm [thread:$0]  %s1183, 16, %s1185, %s1172
        $region92: #{tpu_custom_call.1} parent=63 // pred_fallthru
          _
      $region64: #{tpu_custom_call.1} parent=5 // pred_fallthru
        _
      %p1188 = scmp.le.s32.totalorder 2, %s30
      // Predicated region
      $region93: #{tpu_custom_call.1} parent=5 // pred_check
        %p1189 = pneg %p1188
      $region94: #{tpu_custom_call.1} parent=5 // pred_check_branch
        %1191 = sbr.rel (%p1189) target = $region96
      $region95: #{tpu_custom_call.1} parent=5 // pred_region
        %s1192 = ssub.s32 %s30, 2
        // Predicated region
        $region97: #{tpu_custom_call.1} parent=95 // pred_check
          %p1193 = pneg %p300
        $region98: #{tpu_custom_call.1} parent=95 // pred_check_branch
          %1195 = sbr.rel (%p1193) target = $region100
        $region99: #{tpu_custom_call.1} parent=95 // pred_region
          %s1196 = sand.u32 %s285, 1
          %s1197 = scalar_lea.sflag [#allocation5], %s1196
          %s1198 = sand.u32 %s285, 1
          %s1199 = scalar_lea.vmem [#allocation14], %s1198
          %1201 = dma.done %s1197, 16
        $region100: #{tpu_custom_call.1} parent=95 // pred_fallthru
          _
      $region96: #{tpu_custom_call.1} parent=5 // pred_fallthru
        _
    $region6: #{tpu_custom_call.1} parent=1 // loop_footer
      %s34 = sadd.s32 1, %s30
    $region7: #{tpu_custom_call.1} parent=1 // loop_footer_branch
      %29 = sbr.rel target = $region3
    $region8: #{tpu_custom_call.1} parent=1 // loop_exit
      _
    %1202 = vsyncpa [#allocation4], 1
    %s1203 = scalar_lea.sflag [#allocation4], 1
    %1204 = vsyncpa %s1203, 1
    %1205 = vsyncpa [#allocation7], 1
    %s1206 = scalar_lea.sflag [#allocation7], 1
    %1207 = vsyncpa %s1206, 1
    %1208 = vsyncpa [#allocation10], 1
    %1209 = vsyncpa [#allocation13], 1
    %1210 = vsyncpa [#allocation5], 1
    %s1211 = scalar_lea.sflag [#allocation5], 1
    %1212 = vsyncpa %s1211, 1

</llo_original>
